<compile_context>
chip_gen: v5e
topology: v5e:2x2
jax: 0.10.0
libtpu: 0.0.40
codegen_flags: <defaults>
</compile_context>

<pallas_src>
import jax
import jax.numpy as jnp
from jax.experimental import pallas as pl
from jax.experimental.pallas import tpu as pltpu


def _concat_rows_kernel(x_ref, c_ref, o_ref):
    dx = x_ref.shape[-1]
    if dx % 128 == 0:
        # Split point is lane-aligned: two dense, unmasked stores.
        o_ref[:, :dx] = x_ref[...]
        o_ref[:, dx:] = c_ref[...]
    else:
        # Build the concatenated tile as a value and issue one full-width
        # store (avoids lane-misaligned masked partial stores).
        o_ref[...] = jnp.concatenate([x_ref[...], c_ref[...]], axis=-1)


def _choose_row_tile(rows, d_out, itemsize):
    """Pick a row-tile size TR (multiple of the sublane packing)."""
    sublane = max(8, 32 // itemsize)          # 8 f32 / 16 bf16 / 32 int8
    # Double-buffered VMEM footprint ~= 2*TR*(Dx+Dc+Do)*bytes = 4*TR*Do*bytes.
    vmem_budget = 24 * 1024 * 1024            # leaves headroom on v7x's 64 MiB
    tr = vmem_budget // (4 * d_out * itemsize)
    tr = min(tr, 2048)                        # diminishing returns past ~1-2K rows
    total_bytes = rows * d_out * itemsize
    if total_bytes >= (8 << 20):
        # Enough work to amortize per-step overhead: keep >= ~8 grid steps so
        # both v7x TensorCores get work and the pipeline overlaps DMA/compute.
        tr = min(tr, max(sublane, pl.cdiv(rows, 8)))
    tr = max(sublane, (tr // sublane) * sublane)
    # Never larger than the sublane-rounded row count (edge block is clipped).
    tr = min(tr, pl.cdiv(rows, sublane) * sublane)
    return tr


def sensory_context_concat(x, c):
    """Concatenate x and c along the last axis: (..., Dx),(..., Dc) -> (..., Dx+Dc)."""
    assert x.shape[:-1] == c.shape[:-1], "leading dims must match"
    assert x.dtype == c.dtype, "dtypes must match"
    assert x.ndim >= 1
    *lead, dx = x.shape
    dc = c.shape[-1]
    do = dx + dc

    rows = 1
    for d in lead:
        rows *= d
    x2 = x.reshape(rows, dx)
    c2 = c.reshape(rows, dc)

    itemsize = jnp.dtype(x.dtype).itemsize
    tr = _choose_row_tile(rows, do, itemsize)
    grid_rows = pl.cdiv(rows, tr)

    out2 = pl.pallas_call(
        _concat_rows_kernel,
        out_shape=jax.ShapeDtypeStruct((rows, do), x.dtype),
        grid_spec=pltpu.PrefetchScalarGridSpec(
            num_scalar_prefetch=0,
            grid=(grid_rows,),
            in_specs=[
                pl.BlockSpec((tr, dx), lambda i: (i, 0)),
                pl.BlockSpec((tr, dc), lambda i: (i, 0)),
            ],
            out_specs=pl.BlockSpec((tr, do), lambda i: (i, 0)),
        ),
        compiler_params=pltpu.CompilerParams(
            dimension_semantics=("parallel",),
            vmem_limit_bytes=48 * 1024 * 1024,
        ),
    )(x2, c2)

    return out2.reshape(*lead, do)


if __name__ == "__main__":
    key = jax.random.PRNGKey(0)
    kx, kc, kx2, kc2 = jax.random.split(key, 4)

    # Case 1: shapes matching the module's typical (B, S, D) usage.
    B, S, Dx, Dc = 2, 8, 32, 32
    x = jax.random.normal(kx, (B, S, Dx), dtype=jnp.float32)
    c = jax.random.normal(kc, (B, S, Dc), dtype=jnp.float32)
    out = jax.block_until_ready(sensory_context_concat(x, c))
    ref = jnp.concatenate((x, c), axis=-1)
    assert out.shape == (B, S, Dx + Dc), out.shape
    assert jnp.array_equal(out, ref), "mismatch vs jnp.concatenate (case 1)"

    # Case 2: ragged row count (exercises the clipped edge block) and Do = 128
    # with a lane-misaligned split point (48).
    B2, S2, Dx2, Dc2 = 3, 5, 48, 80
    x2 = jax.random.normal(kx2, (B2, S2, Dx2), dtype=jnp.float32)
    c2 = jax.random.normal(kc2, (B2, S2, Dc2), dtype=jnp.float32)
    out2 = jax.block_until_ready(sensory_context_concat(x2, c2))
    ref2 = jnp.concatenate((x2, c2), axis=-1)
    assert out2.shape == (B2, S2, Dx2 + Dc2), out2.shape
    assert jnp.array_equal(out2, ref2), "mismatch vs jnp.concatenate (case 2)"

    print("KERNEL_OK")
</pallas_src>

<mosaic_0001>
module attributes {stable_mosaic.version = 11 : i64} {
  func.func @_concat_rows_kernel(%arg0: i32, %arg1: memref<16x32xf32, #tpu.memory_space<vmem>>, %arg2: memref<16x32xf32, #tpu.memory_space<vmem>>, %arg3: memref<16x64xf32, #tpu.memory_space<vmem>>) attributes {dimension_semantics = [#tpu.dimension_semantics<parallel>], iteration_bounds = array<i64: 1>, scalar_prefetch = 0 : i64, scratch_operands = 0 : i64, tpu.core_type = #tpu.core_type<tc>, window_params = [{transform_indices = @transform_0, window_bounds = array<i64: 16, 32>}, {transform_indices = @transform_1, window_bounds = array<i64: 16, 32>}, {transform_indices = @transform_2, window_bounds = array<i64: 16, 64>}]} {
    %c0 = arith.constant 0 : index
    %c0_0 = arith.constant 0 : index
    %0 = vector.load %arg1[%c0, %c0_0] : memref<16x32xf32, #tpu.memory_space<vmem>>, vector<16x32xf32>
    %c0_1 = arith.constant 0 : index
    %c0_2 = arith.constant 0 : index
    %1 = vector.load %arg2[%c0_1, %c0_2] : memref<16x32xf32, #tpu.memory_space<vmem>>, vector<16x32xf32>
    %2 = tpu.concatenate %0, %1 in 1 : vector<16x32xf32>, vector<16x32xf32> -> vector<16x64xf32>
    %c0_3 = arith.constant 0 : index
    %c0_4 = arith.constant 0 : index
    %3 = vector.load %arg3[%c0_3, %c0_4] : memref<16x64xf32, #tpu.memory_space<vmem>>, vector<16x64xf32>
    tpu.vector_store %arg3[%c0_3, %c0_4], %2 {strides = array<i32>} : memref<16x64xf32, #tpu.memory_space<vmem>>, vector<16x64xf32>,
    return
  }
  func.func @transform_0(%arg0: i32) -> (i32, i32) {
    %c0_i32 = arith.constant 0 : i32
    %c0_i32_0 = arith.constant 0 : i32
    return %arg0, %c0_i32 : i32, i32
  }
  func.func @transform_1(%arg0: i32) -> (i32, i32) {
    %c0_i32 = arith.constant 0 : i32
    %c0_i32_0 = arith.constant 0 : i32
    return %arg0, %c0_i32 : i32, i32
  }
  func.func @transform_2(%arg0: i32) -> (i32, i32) {
    %c0_i32 = arith.constant 0 : i32
    %c0_i32_0 = arith.constant 0 : i32
    return %arg0, %c0_i32 : i32, i32
  }
}

</mosaic_0001>

<llo_original>
// kernel: tpu_custom_call.1
$region0: #{tpu_custom_call.1}
  #allocation0 [shape = 'u32[]', space=smem, size = 0x4, offset = 0x4, fixed_abs, tag = 'smem constant byte address 0x4 - core index']
  #allocation1 [shape = 'u32[72,128]{1,0:T(1,128)}', space=vmem, size = 0x9000, scoped, tag = 'internal scratch']
  %s0 = inlined_call_operand.hbm [shape: f32[16,32], index: 0, kind: input, shape index: {}]
  %s1 = inlined_call_operand.hbm [shape: f32[16,32], index: 1, kind: input, shape index: {}]
  %s2 = inlined_call_operand.hbm [shape: f32[16,64], index: 2, kind: output, shape index: {}]
  %s3 = sld [smem:[#allocation0]]
  $region26: #{tpu_custom_call.1} parent=0
    _
  %s5 = ssub.s32 1, %s3
  %s6 = scalar_select 0, %s5, %s3
  $region1: #{tpu_custom_call.1} parent=0
    #allocation2 [shape = 'u8[8192]{0}', space=vmem, size = 0x2000, scoped, tag = 'input window, operand 0, single buffered']
    #allocation3 [shape = 's32[1]{0}', space=sflag, size = 0x4, scoped, tag = 'scoped memory for tpu_custom_call.1']
    #allocation4 [shape = 's32[1]{0}', space=sflag, size = 0x4, scoped, tag = 'scoped memory for tpu_custom_call.1']
    #allocation5 [shape = 'u8[8192]{0}', space=vmem, size = 0x2000, scoped, tag = 'input window, operand 1, single buffered']
    #allocation6 [shape = 's32[1]{0}', space=sflag, size = 0x4, scoped, tag = 'scoped memory for tpu_custom_call.1']
    #allocation7 [shape = 'u8[8192]{0}', space=vmem, size = 0x2000, scoped, tag = 'output window, operand 0, single buffered']
    %7 = vsyncpa [#allocation3], 0
    %8 = vsyncpa [#allocation6], 0
    %9 = vsyncpa [#allocation4], 0
    // Predicated region
    $region2: #{tpu_custom_call.1} parent=1 // pred_check
      _
    $region3: #{tpu_custom_call.1} parent=1 // pred_check_branch
      %11 = sbr.rel (0) target = $region5
    $region4: #{tpu_custom_call.1} parent=1 // pred_region
      %13 = vsyncadd [#allocation3], 0
      %s14 = sshll.u32 %s0, 4
      %s15 = int_to_ptr.hbm [resolvable:$true] %s14
      %s16 = sshll.u32 [#allocation2], 4
      %s17 = int_to_ptr.vmem [resolvable:$true] %s16
      %22 = dma.hbm_to_vmem [thread:$0]  %s15, 256, %s17, [#allocation3], 128, 128, 8
    $region5: #{tpu_custom_call.1} parent=1 // pred_fallthru
      _
    // Predicated region
    $region6: #{tpu_custom_call.1} parent=1 // pred_check
      _
    $region7: #{tpu_custom_call.1} parent=1 // pred_check_branch
      %24 = sbr.rel (0) target = $region9
    $region8: #{tpu_custom_call.1} parent=1 // pred_region
      %26 = vsyncadd [#allocation6], 0
      %s27 = sshll.u32 %s1, 4
      %s28 = int_to_ptr.hbm [resolvable:$true] %s27
      %s29 = sshll.u32 [#allocation5], 4
      %s30 = int_to_ptr.vmem [resolvable:$true] %s29
      %35 = dma.hbm_to_vmem [thread:$0]  %s28, 256, %s30, [#allocation6], 128, 128, 8
    $region9: #{tpu_custom_call.1} parent=1 // pred_fallthru
      _
    // Predicated region
    $region10: #{tpu_custom_call.1} parent=1 // pred_check
      _
    $region11: #{tpu_custom_call.1} parent=1 // pred_check_branch
      %37 = sbr.rel (0) target = $region13
    $region12: #{tpu_custom_call.1} parent=1 // pred_region
      %39 = dma.done [#allocation3], 256
    $region13: #{tpu_custom_call.1} parent=1 // pred_fallthru
      _
    // Predicated region
    $region14: #{tpu_custom_call.1} parent=1 // pred_check
      _
    $region15: #{tpu_custom_call.1} parent=1 // pred_check_branch
      %41 = sbr.rel (0) target = $region17
    $region16: #{tpu_custom_call.1} parent=1 // pred_region
      %43 = dma.done [#allocation6], 256
    $region17: #{tpu_custom_call.1} parent=1 // pred_fallthru
      _
    %v44 = vld [vmem:[#allocation2] sm:$0xff]
    %v45 = vld [vmem:[#allocation2 + $0x8] sm:$0xff]
    %v46 = vld [vmem:[#allocation5] sm:$0xff]
    %v47 = vld [vmem:[#allocation5 + $0x8] sm:$0xff]
    %50 = vrot.lane.b32.xlu0 %v46, 32
    %v51 = vpop.permute.xlu0 %50
    %52 = vrot.lane.b32.xlu0 %v47, 32
    %v53 = vpop.permute.xlu0 %52
    %vm56 = vcmask 261120
    %v57 = vsel %vm56, %v44, %v51
    %v58 = vsel %vm56, %v45, %v53
    %vm59 = vcmask 523264
    %60 = vst.msk [vmem:[#allocation7] sm:$0xff] %vm59, %v57
    %61 = vst.msk [vmem:[#allocation7 + $0x8] sm:$0xff] %vm59, %v58
    // Predicated region
    $region18: #{tpu_custom_call.1} parent=1 // pred_check
      _
    $region19: #{tpu_custom_call.1} parent=1 // pred_check_branch
      %63 = sbr.rel (0) target = $region21
    $region20: #{tpu_custom_call.1} parent=1 // pred_region
      %65 = vsyncadd [#allocation4], 0
      %s66 = sshll.u32 [#allocation7], 4
      %s67 = int_to_ptr.vmem [resolvable:$true] %s66
      %s68 = sshll.u32 %s2, 4
      %s69 = int_to_ptr.hbm [resolvable:$true] %s68
      %74 = dma.vmem_to_hbm [thread:$0]  %s67, 256, %s69, [#allocation4], 128, 128, 8
    $region21: #{tpu_custom_call.1} parent=1 // pred_fallthru
      _
    // Predicated region
    $region22: #{tpu_custom_call.1} parent=1 // pred_check
      _
    $region23: #{tpu_custom_call.1} parent=1 // pred_check_branch
      %76 = sbr.rel (0) target = $region25
    $region24: #{tpu_custom_call.1} parent=1 // pred_region
      %78 = dma.done [#allocation4], 256
    $region25: #{tpu_custom_call.1} parent=1 // pred_fallthru
      _
    %79 = vsyncpa [#allocation3], 1
    %80 = vsyncpa [#allocation6], 1
    %81 = vsyncpa [#allocation4], 1

</llo_original>
